<compile_context>
chip_gen: v7x
topology: tpu7x:2x2x1
jax: 0.10.0
libtpu: 0.0.40
codegen_flags: <defaults>
</compile_context>

<pallas_src>
import functools

import jax
import jax.numpy as jnp
from jax.experimental import pallas as pl
from jax.experimental.pallas import tpu as pltpu


def _round_up(n: int, m: int) -> int:
    return ((n + m - 1) // m) * m


def _iotnet_kernel(x_ref,
                   w1_ref, b1_ref,
                   w2_ref, b2_ref,
                   w3_ref, b3_ref,
                   w4_ref, b4_ref,
                   o_ref):
    # x tile: (TM, 21). Weights are bf16; biases/accumulators are f32.
    x = x_ref[...].astype(jnp.bfloat16)

    h = jnp.dot(x, w1_ref[...], preferred_element_type=jnp.float32) + b1_ref[...]
    h = jnp.maximum(h, 0.0)

    h = jnp.dot(h.astype(jnp.bfloat16), w2_ref[...],
                preferred_element_type=jnp.float32) + b2_ref[...]
    h = jnp.maximum(h, 0.0)

    h = jnp.dot(h.astype(jnp.bfloat16), w3_ref[...],
                preferred_element_type=jnp.float32) + b3_ref[...]
    h = jnp.maximum(h, 0.0)

    # Final layer: true-width logits, no activation. The (TM, num_classes)
    # block equals the full output width, so the HBM writeback is contiguous.
    o_ref[...] = jnp.dot(h.astype(jnp.bfloat16), w4_ref[...],
                         preferred_element_type=jnp.float32) + b4_ref[...]


def iotnet_forward(x, params, num_classes, *, tm_max=2048):
    """Forward pass. x: (batch, 21) float32/bf16. Returns (batch, num_classes) f32 logits."""
    (w1, b1), (w2, b2), (w3, b3), (w4, b4) = params
    batch, in_dim = x.shape

    # bf16 matmul operands (f32 accumulation inside the kernel).
    w1b = w1.astype(jnp.bfloat16)
    w2b = w2.astype(jnp.bfloat16)
    w3b = w3.astype(jnp.bfloat16)
    w4b = w4.astype(jnp.bfloat16)

    # --- batch tiling: TM rows per grid step; no wrapper-side padding of x.
    # tm is a multiple of 8 (sublane) and, when large, of 256 (MXU passes);
    # the ragged last block is handled by Pallas (reads clamped, OOB output
    # rows dropped) -- safe because there is no cross-row mixing.
    tm = min(tm_max, _round_up(batch, 8))
    grid = (pl.cdiv(batch, tm),)

    def resident(a):
        # Constant index_map: DMA'd once, stays VMEM-resident across steps.
        return pl.BlockSpec(a.shape, lambda i: (0,) * a.ndim)

    # VMEM budget: double-buffered x/out tiles (lane-padded to 128 in VMEM)
    # plus a few f32 temporaries and the (tiny) resident weights.
    lane_tile_bytes = tm * 128 * 4
    weight_bytes = sum(int(w.size) * w.dtype.itemsize
                       for w in (w1b, b1, w2b, b2, w3b, b3, w4b, b4))
    vmem_bytes = 2 * 2 * lane_tile_bytes + 4 * lane_tile_bytes + weight_bytes + (2 << 20)
    vmem_bytes = int(min(max(vmem_bytes, 16 << 20), 64 << 20))

    flops = 2 * batch * (in_dim * 128 + 128 * 64 + 64 * 32 + 32 * num_classes)
    bytes_accessed = (batch * in_dim * x.dtype.itemsize
                      + batch * num_classes * 4
                      + weight_bytes)
    cost = pl.CostEstimate(flops=int(flops), transcendentals=0,
                           bytes_accessed=int(bytes_accessed))

    out = pl.pallas_call(
        _iotnet_kernel,
        out_shape=jax.ShapeDtypeStruct((batch, num_classes), jnp.float32),
        grid=grid,
        in_specs=[pl.BlockSpec((tm, in_dim), lambda i: (i, 0)),
                  resident(w1b), resident(b1),
                  resident(w2b), resident(b2),
                  resident(w3b), resident(b3),
                  resident(w4b), resident(b4)],
        out_specs=pl.BlockSpec((tm, num_classes), lambda i: (i, 0)),
        compiler_params=pltpu.CompilerParams(
            dimension_semantics=("parallel",),
            vmem_limit_bytes=vmem_bytes),
        cost_estimate=cost,
    )(x, w1b, b1, w2b, b2, w3b, b3, w4b, b4)

    return out


def init_params(key, input_dim=21, num_classes=5):
    """Deterministic init mirroring nn.Linear (weights stored transposed as (in, out))."""
    dims = [input_dim, 128, 64, 32, num_classes]
    params = []
    keys = jax.random.split(key, len(dims) - 1)
    for k, d_in, d_out in zip(keys, dims[:-1], dims[1:]):
        kw, kb = jax.random.split(k)
        bound = 1.0 / jnp.sqrt(d_in)
        w = jax.random.uniform(kw, (d_in, d_out), jnp.float32, -bound, bound)
        b = jax.random.uniform(kb, (1, d_out), jnp.float32, -bound, bound)
        params.append((w, b))
    return params


if __name__ == "__main__":
    key = jax.random.PRNGKey(0)
    k_x, k_p = jax.random.split(key)

    batch, input_dim, num_classes = 8, 21, 5
    x = jax.random.normal(k_x, (batch, input_dim), dtype=jnp.float32)
    params = init_params(k_p, input_dim=input_dim, num_classes=num_classes)

    fwd = jax.jit(functools.partial(iotnet_forward, num_classes=num_classes))
    y = fwd(x, params)
    jax.block_until_ready(y)

    assert y.shape == (batch, num_classes)

    # Reference with matching bf16-operand / f32-accumulate matmuls.
    def ref(x, params):
        h = x
        for i, (w, b) in enumerate(params):
            h = jnp.dot(h.astype(jnp.bfloat16), w.astype(jnp.bfloat16),
                        preferred_element_type=jnp.float32) + b
            if i < 3:
                h = jnp.maximum(h, 0.0)
        return h

    assert bool(jnp.allclose(y, ref(x, params), atol=1e-2, rtol=1e-2))
    print("KERNEL_OK")
</pallas_src>

<mosaic_0001>
module attributes {stable_mosaic.version = 11 : i64} {
  func.func @_iotnet_kernel(%arg0: i32, %arg1: memref<8x21xf32, #tpu.memory_space<vmem>>, %arg2: memref<21x128xbf16, #tpu.memory_space<vmem>>, %arg3: memref<1x128xf32, #tpu.memory_space<vmem>>, %arg4: memref<128x64xbf16, #tpu.memory_space<vmem>>, %arg5: memref<1x64xf32, #tpu.memory_space<vmem>>, %arg6: memref<64x32xbf16, #tpu.memory_space<vmem>>, %arg7: memref<1x32xf32, #tpu.memory_space<vmem>>, %arg8: memref<32x5xbf16, #tpu.memory_space<vmem>>, %arg9: memref<1x5xf32, #tpu.memory_space<vmem>>, %arg10: memref<8x5xf32, #tpu.memory_space<vmem>>) attributes {dimension_semantics = [#tpu.dimension_semantics<parallel>], iteration_bounds = array<i64: 1>, scalar_prefetch = 0 : i64, scratch_operands = 0 : i64, tpu.core_type = #tpu.core_type<tc>, window_params = [{transform_indices = @transform_0, window_bounds = array<i64: 8, 21>}, {pipeline_mode = #tpu.pipeline_mode<synchronous>, transform_indices = @transform_1, window_bounds = array<i64: 21, 128>}, {pipeline_mode = #tpu.pipeline_mode<synchronous>, transform_indices = @transform_2, window_bounds = array<i64: 1, 128>}, {pipeline_mode = #tpu.pipeline_mode<synchronous>, transform_indices = @transform_3, window_bounds = array<i64: 128, 64>}, {pipeline_mode = #tpu.pipeline_mode<synchronous>, transform_indices = @transform_4, window_bounds = array<i64: 1, 64>}, {pipeline_mode = #tpu.pipeline_mode<synchronous>, transform_indices = @transform_5, window_bounds = array<i64: 64, 32>}, {pipeline_mode = #tpu.pipeline_mode<synchronous>, transform_indices = @transform_6, window_bounds = array<i64: 1, 32>}, {pipeline_mode = #tpu.pipeline_mode<synchronous>, transform_indices = @transform_7, window_bounds = array<i64: 32, 5>}, {pipeline_mode = #tpu.pipeline_mode<synchronous>, transform_indices = @transform_8, window_bounds = array<i64: 1, 5>}, {transform_indices = @transform_9, window_bounds = array<i64: 8, 5>}]} {
    %c0 = arith.constant 0 : index
    %c0_0 = arith.constant 0 : index
    %0 = vector.load %arg1[%c0, %c0_0] : memref<8x21xf32, #tpu.memory_space<vmem>>, vector<8x21xf32>
    %1 = arith.truncf %0 : vector<8x21xf32> to vector<8x21xbf16>
    %c0_1 = arith.constant 0 : index
    %c0_2 = arith.constant 0 : index
    %2 = vector.load %arg2[%c0_1, %c0_2] : memref<21x128xbf16, #tpu.memory_space<vmem>>, vector<21x128xbf16>
    %cst = arith.constant dense<0.000000e+00> : vector<8x128xf32>
    %3 = tpu.matmul %1, %2, %cst {dimension_numbers = #tpu.dot_dimension_numbers<[1], [0], [0], [1], [0, 0, 1, 1], [], []>} : vector<8x21xbf16>, vector<21x128xbf16>, vector<8x128xf32> -> vector<8x128xf32>
    %c0_3 = arith.constant 0 : index
    %c0_4 = arith.constant 0 : index
    %4 = vector.load %arg3[%c0_3, %c0_4] : memref<1x128xf32, #tpu.memory_space<vmem>>, vector<1x128xf32>
    %5 = vector.broadcast %4 : vector<1x128xf32> to vector<8x128xf32>
    %6 = arith.addf %3, %5 : vector<8x128xf32>
    %cst_5 = arith.constant 0.000000e+00 : f32
    %7 = vector.broadcast %cst_5 : f32 to vector<8x128xf32>
    %8 = arith.maximumf %6, %7 : vector<8x128xf32>
    %9 = arith.truncf %8 : vector<8x128xf32> to vector<8x128xbf16>
    %c0_6 = arith.constant 0 : index
    %c0_7 = arith.constant 0 : index
    %10 = vector.load %arg4[%c0_6, %c0_7] : memref<128x64xbf16, #tpu.memory_space<vmem>>, vector<128x64xbf16>
    %cst_8 = arith.constant dense<0.000000e+00> : vector<8x64xf32>
    %11 = tpu.matmul %9, %10, %cst_8 {dimension_numbers = #tpu.dot_dimension_numbers<[1], [0], [0], [1], [0, 0, 1, 1], [], []>} : vector<8x128xbf16>, vector<128x64xbf16>, vector<8x64xf32> -> vector<8x64xf32>
    %c0_9 = arith.constant 0 : index
    %c0_10 = arith.constant 0 : index
    %12 = vector.load %arg5[%c0_9, %c0_10] : memref<1x64xf32, #tpu.memory_space<vmem>>, vector<1x64xf32>
    %13 = vector.broadcast %12 : vector<1x64xf32> to vector<8x64xf32>
    %14 = arith.addf %11, %13 : vector<8x64xf32>
    %cst_11 = arith.constant 0.000000e+00 : f32
    %15 = vector.broadcast %cst_11 : f32 to vector<8x64xf32>
    %16 = arith.maximumf %14, %15 : vector<8x64xf32>
    %17 = arith.truncf %16 : vector<8x64xf32> to vector<8x64xbf16>
    %c0_12 = arith.constant 0 : index
    %c0_13 = arith.constant 0 : index
    %18 = vector.load %arg6[%c0_12, %c0_13] : memref<64x32xbf16, #tpu.memory_space<vmem>>, vector<64x32xbf16>
    %cst_14 = arith.constant dense<0.000000e+00> : vector<8x32xf32>
    %19 = tpu.matmul %17, %18, %cst_14 {dimension_numbers = #tpu.dot_dimension_numbers<[1], [0], [0], [1], [0, 0, 1, 1], [], []>} : vector<8x64xbf16>, vector<64x32xbf16>, vector<8x32xf32> -> vector<8x32xf32>
    %c0_15 = arith.constant 0 : index
    %c0_16 = arith.constant 0 : index
    %20 = vector.load %arg7[%c0_15, %c0_16] : memref<1x32xf32, #tpu.memory_space<vmem>>, vector<1x32xf32>
    %21 = vector.broadcast %20 : vector<1x32xf32> to vector<8x32xf32>
    %22 = arith.addf %19, %21 : vector<8x32xf32>
    %cst_17 = arith.constant 0.000000e+00 : f32
    %23 = vector.broadcast %cst_17 : f32 to vector<8x32xf32>
    %24 = arith.maximumf %22, %23 : vector<8x32xf32>
    %25 = arith.truncf %24 : vector<8x32xf32> to vector<8x32xbf16>
    %c0_18 = arith.constant 0 : index
    %c0_19 = arith.constant 0 : index
    %26 = vector.load %arg8[%c0_18, %c0_19] : memref<32x5xbf16, #tpu.memory_space<vmem>>, vector<32x5xbf16>
    %cst_20 = arith.constant dense<0.000000e+00> : vector<8x5xf32>
    %27 = tpu.matmul %25, %26, %cst_20 {dimension_numbers = #tpu.dot_dimension_numbers<[1], [0], [0], [1], [0, 0, 1, 1], [], []>} : vector<8x32xbf16>, vector<32x5xbf16>, vector<8x5xf32> -> vector<8x5xf32>
    %c0_21 = arith.constant 0 : index
    %c0_22 = arith.constant 0 : index
    %28 = vector.load %arg9[%c0_21, %c0_22] : memref<1x5xf32, #tpu.memory_space<vmem>>, vector<1x5xf32>
    %29 = vector.broadcast %28 : vector<1x5xf32> to vector<8x5xf32>
    %30 = arith.addf %27, %29 : vector<8x5xf32>
    %c0_23 = arith.constant 0 : index
    %c0_24 = arith.constant 0 : index
    %31 = vector.load %arg10[%c0_23, %c0_24] : memref<8x5xf32, #tpu.memory_space<vmem>>, vector<8x5xf32>
    tpu.vector_store %arg10[%c0_23, %c0_24], %30 {strides = array<i32>} : memref<8x5xf32, #tpu.memory_space<vmem>>, vector<8x5xf32>,
    return
  }
  func.func @transform_0(%arg0: i32) -> (i32, i32) {
    %c0_i32 = arith.constant 0 : i32
    %c0_i32_0 = arith.constant 0 : i32
    return %arg0, %c0_i32 : i32, i32
  }
  func.func @transform_1(%arg0: i32) -> (i32, i32) {
    %c0_i32 = arith.constant 0 : i32
    %c0_i32_0 = arith.constant 0 : i32
    %c0_i32_1 = arith.constant 0 : i32
    return %c0_i32, %c0_i32_0 : i32, i32
  }
  func.func @transform_2(%arg0: i32) -> (i32, i32) {
    %c0_i32 = arith.constant 0 : i32
    %c0_i32_0 = arith.constant 0 : i32
    %c0_i32_1 = arith.constant 0 : i32
    return %c0_i32, %c0_i32_0 : i32, i32
  }
  func.func @transform_3(%arg0: i32) -> (i32, i32) {
    %c0_i32 = arith.constant 0 : i32
    %c0_i32_0 = arith.constant 0 : i32
    %c0_i32_1 = arith.constant 0 : i32
    return %c0_i32, %c0_i32_0 : i32, i32
  }
  func.func @transform_4(%arg0: i32) -> (i32, i32) {
    %c0_i32 = arith.constant 0 : i32
    %c0_i32_0 = arith.constant 0 : i32
    %c0_i32_1 = arith.constant 0 : i32
    return %c0_i32, %c0_i32_0 : i32, i32
  }
  func.func @transform_5(%arg0: i32) -> (i32, i32) {
    %c0_i32 = arith.constant 0 : i32
    %c0_i32_0 = arith.constant 0 : i32
    %c0_i32_1 = arith.constant 0 : i32
    return %c0_i32, %c0_i32_0 : i32, i32
  }
  func.func @transform_6(%arg0: i32) -> (i32, i32) {
    %c0_i32 = arith.constant 0 : i32
    %c0_i32_0 = arith.constant 0 : i32
    %c0_i32_1 = arith.constant 0 : i32
    return %c0_i32, %c0_i32_0 : i32, i32
  }
  func.func @transform_7(%arg0: i32) -> (i32, i32) {
    %c0_i32 = arith.constant 0 : i32
    %c0_i32_0 = arith.constant 0 : i32
    %c0_i32_1 = arith.constant 0 : i32
    return %c0_i32, %c0_i32_0 : i32, i32
  }
  func.func @transform_8(%arg0: i32) -> (i32, i32) {
    %c0_i32 = arith.constant 0 : i32
    %c0_i32_0 = arith.constant 0 : i32
    %c0_i32_1 = arith.constant 0 : i32
    return %c0_i32, %c0_i32_0 : i32, i32
  }
  func.func @transform_9(%arg0: i32) -> (i32, i32) {
    %c0_i32 = arith.constant 0 : i32
    %c0_i32_0 = arith.constant 0 : i32
    return %arg0, %c0_i32 : i32, i32
  }
}

</mosaic_0001>

<llo_original>
// kernel: iotnet_forward.1
$region0: #{iotnet_forward.1}
  #allocation0 [shape = 'u32[]', space=smem, size = 0x4, offset = 0x4, fixed_abs, tag = 'smem constant byte address 0x4 - core index']
  #allocation1 [shape = 'u32[144,128]{1,0:T(1,128)}', space=vmem, size = 0x12000, scoped, tag = 'internal scratch']
  %s0 = inlined_call_operand.vmem [shape: f32[8,21], index: 0, kind: input, shape index: {}]
  %s1 = inlined_call_operand.vmem [shape: bf16[21,128], index: 1, kind: input, shape index: {}]
  %s2 = inlined_call_operand.vmem [shape: f32[1,128], index: 2, kind: input, shape index: {}]
  %s3 = inlined_call_operand.vmem [shape: bf16[128,64], index: 3, kind: input, shape index: {}]
  %s4 = inlined_call_operand.vmem [shape: f32[1,64], index: 4, kind: input, shape index: {}]
  %s5 = inlined_call_operand.vmem [shape: bf16[64,32], index: 5, kind: input, shape index: {}]
  %s6 = inlined_call_operand.vmem [shape: f32[1,32], index: 6, kind: input, shape index: {}]
  %s7 = inlined_call_operand.vmem [shape: bf16[32,5], index: 7, kind: input, shape index: {}]
  %s8 = inlined_call_operand.vmem [shape: f32[1,5], index: 8, kind: input, shape index: {}]
  %s9 = inlined_call_operand.hbm [shape: f32[8,5], index: 9, kind: output, shape index: {}]
  %s10 = sld [smem:[#allocation0]]
  $region46: #{iotnet_forward.1} parent=0
    _
  %s12 = ssub.s32 1, %s10
  %s13 = scalar_select 0, %s12, %s10
  $region1: #{iotnet_forward.1} parent=0
    #allocation2 [shape = 'u8[4096]{0}', space=vmem, size = 0x1000, scoped, tag = 'output window, operand 0, single buffered']
    #allocation3 [shape = 's32[1]{0}', space=sflag, size = 0x4, scoped, tag = 'scoped memory for iotnet_forward.1']
    %14 = vsyncpa [#allocation3], 0
    // Predicated region
    $region2: #{iotnet_forward.1} parent=1 // pred_check
      _
    $region3: #{iotnet_forward.1} parent=1 // pred_check_branch
      %16 = sbr.rel (0) target = $region5
    $region4: #{iotnet_forward.1} parent=1 // pred_region
      _
    $region5: #{iotnet_forward.1} parent=1 // pred_fallthru
      _
    // Predicated region
    $region6: #{iotnet_forward.1} parent=1 // pred_check
      _
    $region7: #{iotnet_forward.1} parent=1 // pred_check_branch
      %18 = sbr.rel (0) target = $region9
    $region8: #{iotnet_forward.1} parent=1 // pred_region
      _
    $region9: #{iotnet_forward.1} parent=1 // pred_fallthru
      _
    // Predicated region
    $region10: #{iotnet_forward.1} parent=1 // pred_check
      _
    $region11: #{iotnet_forward.1} parent=1 // pred_check_branch
      %20 = sbr.rel (0) target = $region13
    $region12: #{iotnet_forward.1} parent=1 // pred_region
      _
    $region13: #{iotnet_forward.1} parent=1 // pred_fallthru
      _
    // Predicated region
    $region14: #{iotnet_forward.1} parent=1 // pred_check
      _
    $region15: #{iotnet_forward.1} parent=1 // pred_check_branch
      %22 = sbr.rel (0) target = $region17
    $region16: #{iotnet_forward.1} parent=1 // pred_region
      _
    $region17: #{iotnet_forward.1} parent=1 // pred_fallthru
      _
    // Predicated region
    $region18: #{iotnet_forward.1} parent=1 // pred_check
      _
    $region19: #{iotnet_forward.1} parent=1 // pred_check_branch
      %24 = sbr.rel (0) target = $region21
    $region20: #{iotnet_forward.1} parent=1 // pred_region
      _
    $region21: #{iotnet_forward.1} parent=1 // pred_fallthru
      _
    // Predicated region
    $region22: #{iotnet_forward.1} parent=1 // pred_check
      _
    $region23: #{iotnet_forward.1} parent=1 // pred_check_branch
      %26 = sbr.rel (0) target = $region25
    $region24: #{iotnet_forward.1} parent=1 // pred_region
      _
    $region25: #{iotnet_forward.1} parent=1 // pred_fallthru
      _
    // Predicated region
    $region26: #{iotnet_forward.1} parent=1 // pred_check
      _
    $region27: #{iotnet_forward.1} parent=1 // pred_check_branch
      %28 = sbr.rel (0) target = $region29
    $region28: #{iotnet_forward.1} parent=1 // pred_region
      _
    $region29: #{iotnet_forward.1} parent=1 // pred_fallthru
      _
    // Predicated region
    $region30: #{iotnet_forward.1} parent=1 // pred_check
      _
    $region31: #{iotnet_forward.1} parent=1 // pred_check_branch
      %30 = sbr.rel (0) target = $region33
    $region32: #{iotnet_forward.1} parent=1 // pred_region
      _
    $region33: #{iotnet_forward.1} parent=1 // pred_fallthru
      _
    // Predicated region
    $region34: #{iotnet_forward.1} parent=1 // pred_check
      _
    $region35: #{iotnet_forward.1} parent=1 // pred_check_branch
      %32 = sbr.rel (0) target = $region37
    $region36: #{iotnet_forward.1} parent=1 // pred_region
      _
    $region37: #{iotnet_forward.1} parent=1 // pred_fallthru
      _
    %v34 = vld [vmem:[%s0] sm:$0xff]
    %v35 = vpack.c.bf16 %v34, %v34
    %v36 = vld [vmem:[%s1] sm:$0xf]
    %v37 = vld [vmem:[%s1 + $0x4] sm:$0xf]
    %v38 = vld [vmem:[%s1 + $0x8] sm:$0x7]
    %v39 = vld [vmem:[%s2] sm:$0x1]
    %v41 = vlaneseq
    %v42 = vshrl.u32 %v41, 7
    %v43 = vsub.s32 0, %v42
    %v44 = vrot.slane %v39, %v43
    %v49 = vunpack.c.l.b16 %v36
    %v50 = vunpack.c.l.b16 %v37
    %v51 = vunpack.c.l.b16 %v38
    %v52 = vpack.c.b16 %v50, %v49
    %v53 = vpack.c.b16 %v51, %v51
    %vm55 = vcmask 171008
    %v57 = vsel %vm55, %v35, 0
    %vm59 = vcmask 1041408
    %vm60 = vcmask 1042432
    %v61 = vsel %vm59, 4294967295, 65535
    %v62 = vsel %vm60, %v61, 0
    %v64 = vand.u32 %v53, %v62
    %66 = vmatprep.subr.bf16.mxu0 0
    %67 = vmatpush1.bf16.msra.mxu0 %v52
    %68 = vmatprep.subr.bf16.mxu0 0
    %69 = vmatpush1.bf16.msra.mxu0 %v64
    %70 = vmatprep.subr.bf16.mxu0 0
    %71 = vmatpush1.bf16.msra.mxu0 0
    %72 = vmatprep.subr.bf16.mxu0 0
    %73 = vmatpush1.bf16.msra.mxu0 0
    %74 = vmatprep.subr.bf16.mxu0 0
    %75 = vmatpush1.bf16.msra.mxu0 0
    %76 = vmatprep.subr.bf16.mxu0 0
    %77 = vmatpush1.bf16.msra.mxu0 0
    %78 = vmatprep.subr.bf16.mxu0 0
    %79 = vmatpush1.bf16.msra.mxu0 0
    %80 = vmatprep.subr.bf16.mxu0 0
    %81 = vmatpush1.bf16.msra.mxu0 0
    %82 = vmatprep.subr.bf16.mxu0 0
    %83 = vmatpush1.bf16.msra.mxu0 0
    %84 = vmatprep.subr.bf16.mxu0 0
    %85 = vmatpush1.bf16.msra.mxu0 0
    %86 = vmatprep.subr.bf16.mxu0 0
    %87 = vmatpush1.bf16.msra.mxu0 0
    %88 = vmatprep.subr.bf16.mxu0 0
    %89 = vmatpush1.bf16.msra.mxu0 0
    %90 = vmatprep.subr.bf16.mxu0 0
    %91 = vmatpush1.bf16.msra.mxu0 0
    %92 = vmatprep.subr.bf16.mxu0 0
    %93 = vmatpush1.bf16.msra.mxu0 0
    %94 = vmatprep.subr.bf16.mxu0 0
    %95 = vmatpush1.bf16.msra.mxu0 0
    %96 = vmatprep.subr.bf16.mxu0 0
    %97 = vmatpush1.bf16.msra.mxu0 0
    %98 = vmatprep.mubr.bf16.mxu0 0
    %99 = vmatmul.mubr.bf16.gmra.mrb[0].mxu0 %v57
    %v100 = vpop.f32.mrb[0].mxu0
    %v101 = vadd.f32 %v44, %v100
    %v102 = vpop.f32.mrb[0].mxu0
    %v103 = vpop.f32.mrb[0].mxu0
    %v104 = vpop.f32.mrb[0].mxu0
    %105 = vdwg.mxu0
    %v106 = vmax.f32 %v101, 0.0
    %v107 = vpack.c.bf16 %v106, %v106
    %v108 = vld [vmem:[%s3] sm:$0xf]
    %v109 = vld [vmem:[%s3 + $0x4] sm:$0xf]
    %v110 = vld [vmem:[%s3 + $0x8] sm:$0xf]
    %v111 = vld [vmem:[%s3 + $0xc] sm:$0xf]
    %v112 = vld [vmem:[%s3 + $0x10] sm:$0xf]
    %v113 = vld [vmem:[%s3 + $0x14] sm:$0xf]
    %v114 = vld [vmem:[%s3 + $0x18] sm:$0xf]
    %v115 = vld [vmem:[%s3 + $0x1c] sm:$0xf]
    %v116 = vld [vmem:[%s3 + $0x20] sm:$0xf]
    %v117 = vld [vmem:[%s3 + $0x24] sm:$0xf]
    %v118 = vld [vmem:[%s3 + $0x28] sm:$0xf]
    %v119 = vld [vmem:[%s3 + $0x2c] sm:$0xf]
    %v120 = vld [vmem:[%s3 + $0x30] sm:$0xf]
    %v121 = vld [vmem:[%s3 + $0x34] sm:$0xf]
    %v122 = vld [vmem:[%s3 + $0x38] sm:$0xf]
    %v123 = vld [vmem:[%s3 + $0x3c] sm:$0xf]
    %v124 = vld [vmem:[%s4] sm:$0x1]
    %v126 = vlaneseq
    %v127 = vshrl.u32 %v126, 7
    %v128 = vsub.s32 0, %v127
    %v129 = vrot.slane %v124, %v128
    %v147 = vunpack.c.l.b16 %v108
    %v148 = vunpack.c.l.b16 %v109
    %v149 = vunpack.c.l.b16 %v110
    %v150 = vunpack.c.l.b16 %v111
    %v151 = vunpack.c.l.b16 %v112
    %v152 = vunpack.c.l.b16 %v113
    %v153 = vunpack.c.l.b16 %v114
    %v154 = vunpack.c.l.b16 %v115
    %v155 = vunpack.c.l.b16 %v116
    %v156 = vunpack.c.l.b16 %v117
    %v157 = vunpack.c.l.b16 %v118
    %v158 = vunpack.c.l.b16 %v119
    %v159 = vunpack.c.l.b16 %v120
    %v160 = vunpack.c.l.b16 %v121
    %v161 = vunpack.c.l.b16 %v122
    %v162 = vunpack.c.l.b16 %v123
    %v163 = vpack.c.b16 %v148, %v147
    %v164 = vpack.c.b16 %v150, %v149
    %v165 = vpack.c.b16 %v152, %v151
    %v166 = vpack.c.b16 %v154, %v153
    %v167 = vpack.c.b16 %v156, %v155
    %v168 = vpack.c.b16 %v158, %v157
    %v169 = vpack.c.b16 %v160, %v159
    %v170 = vpack.c.b16 %v162, %v161
    %179 = vmatprep.subr.bf16.mxu0 0
    %180 = vmatpush1.bf16.msra.mxu0 %v163
    %181 = vmatprep.subr.bf16.mxu0 0
    %182 = vmatpush1.bf16.msra.mxu0 %v164
    %183 = vmatprep.subr.bf16.mxu0 0
    %184 = vmatpush1.bf16.msra.mxu0 %v165
    %185 = vmatprep.subr.bf16.mxu0 0
    %186 = vmatpush1.bf16.msra.mxu0 %v166
    %187 = vmatprep.subr.bf16.mxu0 0
    %188 = vmatpush1.bf16.msra.mxu0 %v167
    %189 = vmatprep.subr.bf16.mxu0 0
    %190 = vmatpush1.bf16.msra.mxu0 %v168
    %191 = vmatprep.subr.bf16.mxu0 0
    %192 = vmatpush1.bf16.msra.mxu0 %v169
    %193 = vmatprep.subr.bf16.mxu0 0
    %194 = vmatpush1.bf16.msra.mxu0 %v170
    %195 = vmatprep.subr.bf16.mxu0 0
    %196 = vmatpush1.bf16.msra.mxu0 0
    %197 = vmatprep.subr.bf16.mxu0 0
    %198 = vmatpush1.bf16.msra.mxu0 0
    %199 = vmatprep.subr.bf16.mxu0 0
    %200 = vmatpush1.bf16.msra.mxu0 0
    %201 = vmatprep.subr.bf16.mxu0 0
    %202 = vmatpush1.bf16.msra.mxu0 0
    %203 = vmatprep.subr.bf16.mxu0 0
    %204 = vmatpush1.bf16.msra.mxu0 0
    %205 = vmatprep.subr.bf16.mxu0 0
    %206 = vmatpush1.bf16.msra.mxu0 0
    %207 = vmatprep.subr.bf16.mxu0 0
    %208 = vmatpush1.bf16.msra.mxu0 0
    %209 = vmatprep.subr.bf16.mxu0 0
    %210 = vmatpush1.bf16.msra.mxu0 0
    %211 = vmatprep.mubr.bf16.mxu0 0
    %212 = vmatmul.mubr.bf16.gmra.mrb[0].mxu0 %v107
    %v213 = vpop.f32.mrb[0].mxu0
    %v214 = vadd.f32 %v129, %v213
    %v215 = vpop.f32.mrb[0].mxu0
    %v216 = vpop.f32.mrb[0].mxu0
    %v217 = vpop.f32.mrb[0].mxu0
    %218 = vdwg.mxu0
    %v219 = vmax.f32 %v214, 0.0
    %v220 = vpack.c.bf16 %v219, %v219
    %v221 = vld [vmem:[%s5] sm:$0xf]
    %v222 = vld [vmem:[%s5 + $0x4] sm:$0xf]
    %v223 = vld [vmem:[%s5 + $0x8] sm:$0xf]
    %v224 = vld [vmem:[%s5 + $0xc] sm:$0xf]
    %v225 = vld [vmem:[%s5 + $0x10] sm:$0xf]
    %v226 = vld [vmem:[%s5 + $0x14] sm:$0xf]
    %v227 = vld [vmem:[%s5 + $0x18] sm:$0xf]
    %v228 = vld [vmem:[%s5 + $0x1c] sm:$0xf]
    %v229 = vld [vmem:[%s6] sm:$0x1]
    %v231 = vlaneseq
    %v232 = vshrl.u32 %v231, 7
    %v233 = vsub.s32 0, %v232
    %v234 = vrot.slane %v229, %v233
    %v244 = vunpack.c.l.b16 %v221
    %v245 = vunpack.c.l.b16 %v222
    %v246 = vunpack.c.l.b16 %v223
    %v247 = vunpack.c.l.b16 %v224
    %v248 = vunpack.c.l.b16 %v225
    %v249 = vunpack.c.l.b16 %v226
    %v250 = vunpack.c.l.b16 %v227
    %v251 = vunpack.c.l.b16 %v228
    %v252 = vpack.c.b16 %v245, %v244
    %v253 = vpack.c.b16 %v247, %v246
    %v254 = vpack.c.b16 %v249, %v248
    %v255 = vpack.c.b16 %v251, %v250
    %vm260 = vcmask 523264
    %v262 = vsel %vm260, %v220, 0
    %264 = vmatprep.subr.bf16.mxu0 0
    %265 = vmatpush1.bf16.msra.mxu0 %v252
    %266 = vmatprep.subr.bf16.mxu0 0
    %267 = vmatpush1.bf16.msra.mxu0 %v253
    %268 = vmatprep.subr.bf16.mxu0 0
    %269 = vmatpush1.bf16.msra.mxu0 %v254
    %270 = vmatprep.subr.bf16.mxu0 0
    %271 = vmatpush1.bf16.msra.mxu0 %v255
    %272 = vmatprep.subr.bf16.mxu0 0
    %273 = vmatpush1.bf16.msra.mxu0 0
    %274 = vmatprep.subr.bf16.mxu0 0
    %275 = vmatpush1.bf16.msra.mxu0 0
    %276 = vmatprep.subr.bf16.mxu0 0
    %277 = vmatpush1.bf16.msra.mxu0 0
    %278 = vmatprep.subr.bf16.mxu0 0
    %279 = vmatpush1.bf16.msra.mxu0 0
    %280 = vmatprep.subr.bf16.mxu0 0
    %281 = vmatpush1.bf16.msra.mxu0 0
    %282 = vmatprep.subr.bf16.mxu0 0
    %283 = vmatpush1.bf16.msra.mxu0 0
    %284 = vmatprep.subr.bf16.mxu0 0
    %285 = vmatpush1.bf16.msra.mxu0 0
    %286 = vmatprep.subr.bf16.mxu0 0
    %287 = vmatpush1.bf16.msra.mxu0 0
    %288 = vmatprep.subr.bf16.mxu0 0
    %289 = vmatpush1.bf16.msra.mxu0 0
    %290 = vmatprep.subr.bf16.mxu0 0
    %291 = vmatpush1.bf16.msra.mxu0 0
    %292 = vmatprep.subr.bf16.mxu0 0
    %293 = vmatpush1.bf16.msra.mxu0 0
    %294 = vmatprep.subr.bf16.mxu0 0
    %295 = vmatpush1.bf16.msra.mxu0 0
    %296 = vmatprep.mubr.bf16.mxu0 0
    %297 = vmatmul.mubr.bf16.gmra.mrb[0].mxu0 %v262
    %v298 = vpop.f32.mrb[0].mxu0
    %v299 = vadd.f32 %v234, %v298
    %v300 = vpop.f32.mrb[0].mxu0
    %v301 = vpop.f32.mrb[0].mxu0
    %v302 = vpop.f32.mrb[0].mxu0
    %303 = vdwg.mxu0
    %v304 = vmax.f32 %v299, 0.0
    %v305 = vpack.c.bf16 %v304, %v304
    %v306 = vld [vmem:[%s7] sm:$0xf]
    %v307 = vld [vmem:[%s7 + $0x4] sm:$0xf]
    %v308 = vld [vmem:[%s7 + $0x8] sm:$0xf]
    %v309 = vld [vmem:[%s7 + $0xc] sm:$0xf]
    %v310 = vld [vmem:[%s8] sm:$0x1]
    %v312 = vlaneseq
    %v313 = vshrl.u32 %v312, 7
    %v314 = vsub.s32 0, %v313
    %v315 = vrot.slane %v310, %v314
    %v321 = vunpack.c.l.b16 %v306
    %v322 = vunpack.c.l.b16 %v307
    %v323 = vunpack.c.l.b16 %v308
    %v324 = vunpack.c.l.b16 %v309
    %v325 = vpack.c.b16 %v322, %v321
    %v326 = vpack.c.b16 %v324, %v323
    %vm329 = vcmask 261120
    %v331 = vsel %vm329, %v305, 0
    %333 = vmatprep.subr.bf16.mxu0 0
    %334 = vmatpush1.bf16.msra.mxu0 %v325
    %335 = vmatprep.subr.bf16.mxu0 0
    %336 = vmatpush1.bf16.msra.mxu0 %v326
    %337 = vmatprep.subr.bf16.mxu0 0
    %338 = vmatpush1.bf16.msra.mxu0 0
    %339 = vmatprep.subr.bf16.mxu0 0
    %340 = vmatpush1.bf16.msra.mxu0 0
    %341 = vmatprep.subr.bf16.mxu0 0
    %342 = vmatpush1.bf16.msra.mxu0 0
    %343 = vmatprep.subr.bf16.mxu0 0
    %344 = vmatpush1.bf16.msra.mxu0 0
    %345 = vmatprep.subr.bf16.mxu0 0
    %346 = vmatpush1.bf16.msra.mxu0 0
    %347 = vmatprep.subr.bf16.mxu0 0
    %348 = vmatpush1.bf16.msra.mxu0 0
    %349 = vmatprep.subr.bf16.mxu0 0
    %350 = vmatpush1.bf16.msra.mxu0 0
    %351 = vmatprep.subr.bf16.mxu0 0
    %352 = vmatpush1.bf16.msra.mxu0 0
    %353 = vmatprep.subr.bf16.mxu0 0
    %354 = vmatpush1.bf16.msra.mxu0 0
    %355 = vmatprep.subr.bf16.mxu0 0
    %356 = vmatpush1.bf16.msra.mxu0 0
    %357 = vmatprep.subr.bf16.mxu0 0
    %358 = vmatpush1.bf16.msra.mxu0 0
    %359 = vmatprep.subr.bf16.mxu0 0
    %360 = vmatpush1.bf16.msra.mxu0 0
    %361 = vmatprep.subr.bf16.mxu0 0
    %362 = vmatpush1.bf16.msra.mxu0 0
    %363 = vmatprep.subr.bf16.mxu0 0
    %364 = vmatpush1.bf16.msra.mxu0 0
    %365 = vmatprep.mubr.bf16.mxu0 0
    %366 = vmatmul.mubr.bf16.gmra.mrb[0].mxu0 %v331
    %v367 = vpop.f32.mrb[0].mxu0
    %v368 = vadd.f32 %v315, %v367
    %v369 = vpop.f32.mrb[0].mxu0
    %v370 = vpop.f32.mrb[0].mxu0
    %v371 = vpop.f32.mrb[0].mxu0
    %372 = vdwg.mxu0
    %vm373 = vcmask 39936
    %374 = vst.msk [vmem:[#allocation2] sm:$0xff] %vm373, %v368
    // Predicated region
    $region38: #{iotnet_forward.1} parent=1 // pred_check
      _
    $region39: #{iotnet_forward.1} parent=1 // pred_check_branch
      %376 = sbr.rel (0) target = $region41
    $region40: #{iotnet_forward.1} parent=1 // pred_region
      %s378 = ssub.s32 128, 128
      %379 = vsyncadd [#allocation3], %s378
      %s381 = sshll.u32 [#allocation2], 4
      %s382 = int_to_ptr.vmem [resolvable:$true] %s381
      %384 = dma.vmem_to_hbm [thread:$0]  %s382, 128, %s9, [#allocation3]
    $region41: #{iotnet_forward.1} parent=1 // pred_fallthru
      _
    // Predicated region
    $region42: #{iotnet_forward.1} parent=1 // pred_check
      _
    $region43: #{iotnet_forward.1} parent=1 // pred_check_branch
      %386 = sbr.rel (0) target = $region45
    $region44: #{iotnet_forward.1} parent=1 // pred_region
      %387 = dma.done [#allocation3], 128
    $region45: #{iotnet_forward.1} parent=1 // pred_fallthru
      _
    %388 = vsyncpa [#allocation3], 1

</llo_original>
